<compile_context>
chip_gen: v6e
topology: v6e:2x2x1
jax: 0.10.0
libtpu: 0.0.40
codegen_flags: <defaults>
</compile_context>

<pallas_src>
import jax
import jax.numpy as jnp
import numpy as np
from jax.experimental import pallas as pl
from jax.experimental.pallas import tpu as pltpu

EPS = 1e-6


def _cla_kernel(sc_ref, x_ref, wn_ref, out_ref):
    """One batch tile.

    sc_ref : SMEM (4,) f32 scalars [w0^2, w1^2, tanh(-b0), exp(-b1^2)] (prefetched)
    x_ref  : VMEM (TB, 2*N) caller dtype; per row: [rot | abs]
    wn_ref : VMEM (1, N) f32 normalized weights
    out_ref: VMEM (TB, N) caller dtype, weighted distance field
    """
    n = out_ref.shape[1]
    # Upcast to f32 in-kernel (compute stays f32 even for bf16 I/O; fine on v5e).
    rot = x_ref[:, :n].astype(jnp.float32)       # (TB, N)
    av = x_ref[:, n:].astype(jnp.float32)        # (TB, N)
    wn = wn_ref[...]                             # (1, N)

    w0sq = sc_ref[0]
    w1sq = sc_ref[1]
    tanh_nb0 = sc_ref[2]                         # tanh(-bias[0])
    exp_nb1sq = sc_ref[3]                        # exp(-bias[1]**2)

    # Weighted Frechet-mean style reductions over the flattened field.
    # (If a bundle profile ever shows VALU/XLU saturation at large N, these two
    # lane reductions can be fused into one MXU matmul against a block-diagonal
    # [wn | wn] rhs; irrelevant while HBM-bound.)
    la = jnp.log(av + EPS)                                                    # (TB, N)
    m_rot = jnp.sum(rot * wn, axis=1, keepdims=True) * tanh_nb0               # (TB, 1)
    m_abs = jnp.exp(jnp.sum(la * wn, axis=1, keepdims=True)) + exp_nb1sq      # (TB, 1)

    # SOmetric / P1metric distances.  Reference: |log(av / (m_abs+eps))| =
    # |log(av) - log(m_abs+eps)|.  We reuse la = log(av+eps): delta is
    # O(EPS/av), halves per-element EUP work and drops one full-tile temporary.
    dist_rot = jnp.abs(rot - m_rot)
    dist_abs = jnp.abs(la - jnp.log(m_abs + EPS))

    out_ref[...] = (w0sq * dist_rot + w1sq * dist_abs).astype(out_ref.dtype)


def _round_up(v, m):
    return (v + m - 1) // m * m


def _vmem_capacity_bytes():
    try:
        return int(pltpu.get_tpu_info().vmem_capacity_bytes)
    except Exception:
        return 64 * 1024 * 1024   # conservative (v7x-sized) fallback


def complex_linearangle2dmw_outfield(x, weight, bias, weights, *, tb=None,
                                     vmem_budget_bytes=None):
    """x: (B, 2, D1, D2, D3). Returns (B, D1, D2, D3) in x's (floating) dtype."""
    B, C, D1, D2, D3 = x.shape
    assert C == 2, "channel dim must be 2 (rot, abs)"
    N = D1 * D2 * D3
    assert weights.shape == (N,), "input_dim must equal D1*D2*D3"

    x = jnp.asarray(x)
    if not jnp.issubdtype(x.dtype, jnp.floating):
        x = x.astype(jnp.float32)
    xdt = x.dtype
    xsz = jnp.dtype(xdt).itemsize
    # Sublane packing multiple: f32 -> 8, bf16/f16 -> 16, fp8 -> 32.
    sub = 8 * max(1, 4 // xsz)

    # Generation-aware VMEM budget: ~48 MiB on v7x (64 MiB physical),
    # ~96 MiB on v5e/v6e (128 MiB physical).
    capacity = _vmem_capacity_bytes()
    if vmem_budget_bytes is None:
        vmem_budget_bytes = capacity * 3 // 4

    # Per batch row, double-buffered: x tile (2N) in + out tile (N), in I/O dtype.
    per_row = 2 * (2 * N * xsz) + 2 * (N * xsz)
    if tb is None:
        tb_fit = vmem_budget_bytes // max(per_row, 1)
        tb_fit = max(sub, min(1024, (tb_fit // sub) * sub))
        # Aim for >=4 grid steps when B allows (megacore sharding on v7x +
        # pipeline depth), otherwise take the largest tile that fits.
        tb_par = _round_up(max(1, -(-B // 4)), sub)
        tb = max(sub, min(tb_fit, tb_par))
    else:
        tb = max(sub, (int(tb) // sub) * sub)
    if B <= tb and B % sub != 0:
        # Single full-batch block: block dim == array dim, no boundary masking.
        tb = B
    grid = (pl.cdiv(B, tb),)

    # Real double-buffered footprint + weights row + headroom (never a
    # hard-coded limit; clamp below physical VMEM).
    footprint = tb * per_row + 2 * N * 4 + (2 << 20)
    vmem_limit = int(min(capacity - (4 << 20), max(footprint, 8 << 20)))

    # Hoisted parameter math (done once in XLA, not per grid step).
    weight = jnp.asarray(weight, jnp.float32)
    bias = jnp.asarray(bias, jnp.float32)
    w = jnp.asarray(weights, jnp.float32)
    wn_row = ((w * w) / jnp.sum(w * w)).reshape(1, N)    # weightNormalize1
    sc = jnp.stack([weight[0] * weight[0],
                    weight[1] * weight[1],
                    jnp.tanh(-bias[0]),
                    jnp.exp(-(bias[1] * bias[1]))]).astype(jnp.float32)

    # Channel-major flattening WITHOUT the 5-D transpose (pure reshape, no copy,
    # no padding: full-extent lane blocks + batch boundary masking handle
    # unaligned shapes in-kernel).
    x2 = x.reshape(B, 2 * N)

    out = pl.pallas_call(
        _cla_kernel,
        out_shape=jax.ShapeDtypeStruct((B, N), xdt),
        grid_spec=pltpu.PrefetchScalarGridSpec(
            num_scalar_prefetch=1,                                 # sc -> SMEM
            grid=grid,
            in_specs=[
                # [rot | abs] batch tile. (On v5e, if profiling ever shows
                # exposed DMA at tiny tb, add pipeline_mode=pl.Buffered(3).)
                pl.BlockSpec((tb, 2 * N), lambda i, s: (i, 0)),
                pl.BlockSpec((1, N), lambda i, s: (0, 0)),         # weights (resident)
            ],
            out_specs=pl.BlockSpec((tb, N), lambda i, s: (i, 0)),
        ),
        compiler_params=pltpu.CompilerParams(
            dimension_semantics=("parallel",),    # shard batch tiles across TCs
            vmem_limit_bytes=vmem_limit,
        ),
    )(sc, x2, wn_row)

    return out.reshape(B, D1, D2, D3)


def _reference(x, weight, bias, weights):
    """Pure-numpy replica of the PyTorch forward (for correctness check)."""
    x = np.asarray(x, np.float32)
    B, _, D1, D2, D3 = x.shape
    N = D1 * D2 * D3
    all_data = np.transpose(x, (0, 2, 3, 4, 1)).reshape(B, N, 2)
    rot, av = all_data[..., 0], all_data[..., 1]
    w = np.asarray(weights, np.float32)
    b = np.asarray(bias, np.float32)
    wt = np.asarray(weight, np.float32)
    wn = w * w / np.sum(w * w)
    m_rot = np.sum(rot * wn, axis=1) * np.tanh(-b[0])
    m_abs = np.exp(np.sum(np.log(av + EPS) * wn, axis=1)) + np.exp(-b[1] ** 2)
    dist_rot = np.abs(rot - m_rot[:, None])
    dist_abs = np.abs(np.log(av / (m_abs[:, None] + EPS)))
    return (wt[0] ** 2 * dist_rot + wt[1] ** 2 * dist_abs).reshape(B, D1, D2, D3)


if __name__ == "__main__":
    key = jax.random.PRNGKey(0)

    def _make(key, B, D1, D2, D3, dtype=jnp.float32):
        k = jax.random.split(key, 5)
        N = D1 * D2 * D3
        x = jax.random.uniform(k[0], (B, 2, D1, D2, D3), jnp.float32,
                               minval=0.1, maxval=1.0).astype(dtype)
        weight = jax.random.uniform(k[1], (2,), jnp.float32)
        bias = jax.random.uniform(k[2], (2,), jnp.float32)
        weights = jax.random.uniform(k[3], (N,), jnp.float32)
        return k[4], x, weight, bias, weights

    # Case 1: lane-aligned N=128, B=32 -> 4 batch grid steps of 8 rows.
    key, x, weight, bias, weights = _make(key, 32, 2, 8, 8)
    out = jax.block_until_ready(
        complex_linearangle2dmw_outfield(x, weight, bias, weights))
    ref = _reference(np.asarray(x, np.float32), weight, bias, weights)
    np.testing.assert_allclose(np.asarray(out), ref, rtol=1e-5, atol=3e-5)

    # Case 2: tiny unaligned shapes (B=2, N=32): full-batch single block,
    # unaligned in-kernel channel slice, no HBM padding.
    key, x, weight, bias, weights = _make(key, 2, 2, 4, 4)
    out = jax.block_until_ready(
        complex_linearangle2dmw_outfield(x, weight, bias, weights))
    ref = _reference(np.asarray(x, np.float32), weight, bias, weights)
    np.testing.assert_allclose(np.asarray(out), ref, rtol=1e-5, atol=3e-5)

    # Case 3: bf16 I/O path (stream narrow dtype, upcast in-kernel, bf16 out).
    key, x, weight, bias, weights = _make(key, 12, 2, 4, 4, dtype=jnp.bfloat16)
    out = jax.block_until_ready(
        complex_linearangle2dmw_outfield(x, weight, bias, weights))
    ref = _reference(np.asarray(x.astype(jnp.float32)), weight, bias, weights)
    np.testing.assert_allclose(np.asarray(out.astype(jnp.float32)), ref,
                               rtol=2e-2, atol=2e-2)

    # Case 4: B=20 with forced tb=8 -> non-divisible batch grid (boundary
    # masking on the last block instead of HBM padding / output slicing).
    key, x, weight, bias, weights = _make(key, 20, 2, 4, 4)
    out = jax.block_until_ready(
        complex_linearangle2dmw_outfield(x, weight, bias, weights, tb=8))
    ref = _reference(np.asarray(x, np.float32), weight, bias, weights)
    np.testing.assert_allclose(np.asarray(out), ref, rtol=1e-5, atol=3e-5)

    print("KERNEL_OK")
</pallas_src>

<mosaic_0001>
module attributes {stable_mosaic.version = 11 : i64} {
  func.func @_cla_kernel(%arg0: i32, %arg1: memref<4xf32, #tpu.memory_space<smem>>, %arg2: memref<8x256xf32, #tpu.memory_space<vmem>>, %arg3: memref<1x128xf32, #tpu.memory_space<vmem>>, %arg4: memref<8x128xf32, #tpu.memory_space<vmem>>) attributes {dimension_semantics = [#tpu.dimension_semantics<parallel>], iteration_bounds = array<i64: 4>, scalar_prefetch = 1 : i64, scratch_operands = 0 : i64, tpu.core_type = #tpu.core_type<tc>, window_params = [{transform_indices = @transform_0, window_bounds = array<i64: 8, 256>}, {pipeline_mode = #tpu.pipeline_mode<synchronous>, transform_indices = @transform_1, window_bounds = array<i64: 1, 128>}, {transform_indices = @transform_2, window_bounds = array<i64: 8, 128>}]} {
    %c0 = arith.constant 0 : index
    %c0_0 = arith.constant 0 : index
    %0 = vector.load %arg2[%c0, %c0_0] : memref<8x256xf32, #tpu.memory_space<vmem>>, vector<8x128xf32>
    %c0_1 = arith.constant 0 : index
    %c128 = arith.constant 128 : index
    %1 = vector.load %arg2[%c0_1, %c128] : memref<8x256xf32, #tpu.memory_space<vmem>>, vector<8x128xf32>
    %c0_2 = arith.constant 0 : index
    %c0_3 = arith.constant 0 : index
    %2 = vector.load %arg3[%c0_2, %c0_3] : memref<1x128xf32, #tpu.memory_space<vmem>>, vector<1x128xf32>
    %c0_4 = arith.constant 0 : index
    %3 = memref.load %arg1[%c0_4] : memref<4xf32, #tpu.memory_space<smem>>
    %c1 = arith.constant 1 : index
    %4 = memref.load %arg1[%c1] : memref<4xf32, #tpu.memory_space<smem>>
    %c2 = arith.constant 2 : index
    %5 = memref.load %arg1[%c2] : memref<4xf32, #tpu.memory_space<smem>>
    %c3 = arith.constant 3 : index
    %6 = memref.load %arg1[%c3] : memref<4xf32, #tpu.memory_space<smem>>
    %cst = arith.constant 9.99999997E-7 : f32
    %7 = vector.broadcast %cst : f32 to vector<8x128xf32>
    %8 = arith.addf %1, %7 : vector<8x128xf32>
    %9 = math.log %8 : vector<8x128xf32>
    %10 = vector.broadcast %2 : vector<1x128xf32> to vector<8x128xf32>
    %11 = arith.mulf %0, %10 : vector<8x128xf32>
    %cst_5 = arith.constant dense<0.000000e+00> : vector<8xf32>
    %12 = vector.multi_reduction <add>, %11, %cst_5 [1] : vector<8x128xf32> to vector<8xf32>
    %13 = vector.shape_cast %12 : vector<8xf32> to vector<8x1xf32>
    %14 = vector.broadcast %5 : f32 to vector<8x1xf32>
    %15 = arith.mulf %13, %14 : vector<8x1xf32>
    %16 = vector.broadcast %2 : vector<1x128xf32> to vector<8x128xf32>
    %17 = arith.mulf %9, %16 : vector<8x128xf32>
    %cst_6 = arith.constant dense<0.000000e+00> : vector<8xf32>
    %18 = vector.multi_reduction <add>, %17, %cst_6 [1] : vector<8x128xf32> to vector<8xf32>
    %19 = vector.shape_cast %18 : vector<8xf32> to vector<8x1xf32>
    %20 = math.exp %19 : vector<8x1xf32>
    %21 = vector.broadcast %6 : f32 to vector<8x1xf32>
    %22 = arith.addf %20, %21 : vector<8x1xf32>
    %23 = vector.broadcast %15 : vector<8x1xf32> to vector<8x128xf32>
    %24 = arith.subf %0, %23 : vector<8x128xf32>
    %25 = math.absf %24 : vector<8x128xf32>
    %cst_7 = arith.constant 9.99999997E-7 : f32
    %26 = vector.broadcast %cst_7 : f32 to vector<8x1xf32>
    %27 = arith.addf %22, %26 : vector<8x1xf32>
    %28 = math.log %27 : vector<8x1xf32>
    %29 = vector.broadcast %28 : vector<8x1xf32> to vector<8x128xf32>
    %30 = arith.subf %9, %29 : vector<8x128xf32>
    %31 = math.absf %30 : vector<8x128xf32>
    %32 = vector.broadcast %3 : f32 to vector<8x128xf32>
    %33 = arith.mulf %32, %25 : vector<8x128xf32>
    %34 = vector.broadcast %4 : f32 to vector<8x128xf32>
    %35 = arith.mulf %34, %31 : vector<8x128xf32>
    %36 = arith.addf %33, %35 : vector<8x128xf32>
    %c0_8 = arith.constant 0 : index
    %c0_9 = arith.constant 0 : index
    %37 = vector.load %arg4[%c0_8, %c0_9] : memref<8x128xf32, #tpu.memory_space<vmem>>, vector<8x128xf32>
    tpu.vector_store %arg4[%c0_8, %c0_9], %36 {strides = array<i32>} : memref<8x128xf32, #tpu.memory_space<vmem>>, vector<8x128xf32>,
    return
  }
  func.func @transform_0(%arg0: i32, %arg1: memref<4xf32, #tpu.memory_space<smem>>) -> (i32, i32) {
    %c0_i32 = arith.constant 0 : i32
    %c0_i32_0 = arith.constant 0 : i32
    return %arg0, %c0_i32 : i32, i32
  }
  func.func @transform_1(%arg0: i32, %arg1: memref<4xf32, #tpu.memory_space<smem>>) -> (i32, i32) {
    %c0_i32 = arith.constant 0 : i32
    %c0_i32_0 = arith.constant 0 : i32
    %c0_i32_1 = arith.constant 0 : i32
    return %c0_i32, %c0_i32_0 : i32, i32
  }
  func.func @transform_2(%arg0: i32, %arg1: memref<4xf32, #tpu.memory_space<smem>>) -> (i32, i32) {
    %c0_i32 = arith.constant 0 : i32
    %c0_i32_0 = arith.constant 0 : i32
    return %arg0, %c0_i32 : i32, i32
  }
}

</mosaic_0001>

<llo_original>
// kernel: tpu_custom_call.1
$region0: #{tpu_custom_call.1}
  #allocation0 [shape = 'u32[]', space=smem, size = 0x4, offset = 0x4, fixed_abs, tag = 'smem constant byte address 0x4 - core index']
  #allocation1 [shape = 'u32[144,128]{1,0:T(1,128)}', space=vmem, size = 0x12000, scoped, tag = 'internal scratch']
  #allocation2 [shape = 's32[1]{0}', space=sflag, size = 0x4, scoped, tag = 'scoped memory for tpu_custom_call.1']
  #allocation3 [shape = 'u8[512]{0}', space=smem, size = 0x200, scoped, tag = 'prefetched SMEM operand 0']
  %s0 = inlined_call_operand.hbm [shape: f32[4], index: 0, kind: input, shape index: {}]
  %s1 = inlined_call_operand.hbm [shape: f32[32,256], index: 1, kind: input, shape index: {}]
  %s2 = inlined_call_operand.vmem [shape: f32[1,128], index: 2, kind: input, shape index: {}]
  %s3 = inlined_call_operand.hbm [shape: f32[32,128], index: 3, kind: output, shape index: {}]
  %s4 = sld [smem:[#allocation0]]
  $region45: #{tpu_custom_call.1} parent=0
    _
  %s6 = ssub.s32 1, %s4
  %s7 = scalar_select 0, %s6, %s4
  %9 = dma.hbm_to_smem %s0, 16, [#allocation3], [#allocation2]
  %10 = dma.done [#allocation2], 16
  %11 = sfence
  $region1: #{tpu_custom_call.1} parent=0
    #allocation4 [shape = 'u8[16384]{0}', space=vmem, size = 0x4000, scoped, tag = 'input window, operand 1']
    #allocation5 [shape = 's32[2]{0}', space=sflag, size = 0x8, scoped, tag = 'scoped memory for tpu_custom_call.1']
    #allocation6 [shape = 's32[2]{0}', space=sflag, size = 0x8, scoped, tag = 'scoped memory for tpu_custom_call.1']
    #allocation7 [shape = 'u8[8192]{0}', space=vmem, size = 0x2000, scoped, tag = 'output window, operand 0']
    %12 = vsyncpa [#allocation5], 0
    %s13 = scalar_lea.sflag [#allocation5], 1
    %14 = vsyncpa %s13, 0
    %15 = vsyncpa [#allocation6], 0
    %s16 = scalar_lea.sflag [#allocation6], 1
    %17 = vsyncpa %s16, 0
    loop: start=0, step=1, limit=6
    $region2: #{tpu_custom_call.1} parent=1 // loop_pre_header
      _
    $region3: #{tpu_custom_call.1} parent=1 // loop_header
      %s19 = sphi 0, %s23
      %p20 = scmp.ge.s32.totalorder %s19, 6
      %s29 = sphi 0, %s31
      %s32 = sphi 0, %s29
      %s33 = sphi 0, %s32
      %s49 = sphi 0, %s33
      %s53 = sphi 0, %s53
      %s55 = sphi 0, %s53
      %s56 = sphi 0, %s55
      %s70 = sphi 0, %s56
      %s76 = sphi 0, %s78
      %s79 = sphi 0, %s76
      %s80 = sphi 0, %s79
      %s96 = sphi 0, %s80
    $region4: #{tpu_custom_call.1} parent=1 // loop_header_branch
      %22 = sbr.rel (%p20) target = $region8
    $region5: #{tpu_custom_call.1} parent=1 // loop_body
      %s24 = ssub.s32 %s19, 1
      %s25 = ssub.s32 %s19, 2
      %s26 = sadd.s32 %s19, 1
      %s27 = ssub.s32 %s19, %s26
      %p28 = scmp.eq.s32.totalorder %s27, 0
      %s30 = sadd.s32 %s29, 1
      %s31 = scalar_select %p28, %s29, %s30
      %p34 = pneg %p28
      %p35 = scmp.eq.s32.totalorder %s19, 3
      %p36 = por %p34, %p35
      %p37 = scmp.ne.s32.totalorder %s29, %s32
      %p38 = scmp.eq.s32.totalorder %s19, 0
      %p39 = por %p37, %p38
      %p40 = scmp.ne.s32.totalorder %s29, %s32
      %p41 = scmp.eq.s32.totalorder %s24, 3
      %p42 = por %p40, %p41
      %p43 = scmp.ne.s32.totalorder %s32, %s33
      %p44 = scmp.eq.s32.totalorder %s24, 0
      %p45 = por %p43, %p44
      %p46 = scmp.ne.s32.totalorder %s32, %s33
      %p47 = scmp.eq.s32.totalorder %s25, 3
      %p48 = por %p46, %p47
      %p50 = scmp.ne.s32.totalorder %s33, %s49
      %p51 = scmp.eq.s32.totalorder %s25, 0
      %p52 = por %p50, %p51
      %s54 = sadd.s32 %s53, 1
      %p57 = scmp.eq.s32.totalorder %s19, 3
      %p58 = scmp.ne.s32.totalorder %s53, %s55
      %p59 = scmp.eq.s32.totalorder %s19, 0
      %p60 = por %p58, %p59
      %p61 = scmp.ne.s32.totalorder %s53, %s55
      %p62 = scmp.eq.s32.totalorder %s24, 3
      %p63 = por %p61, %p62
      %p64 = scmp.ne.s32.totalorder %s55, %s56
      %p65 = scmp.eq.s32.totalorder %s24, 0
      %p66 = por %p64, %p65
      %p67 = scmp.ne.s32.totalorder %s55, %s56
      %p68 = scmp.eq.s32.totalorder %s25, 3
      %p69 = por %p67, %p68
      %p71 = scmp.ne.s32.totalorder %s56, %s70
      %p72 = scmp.eq.s32.totalorder %s25, 0
      %p73 = por %p71, %p72
      %s74 = ssub.s32 %s19, %s26
      %p75 = scmp.eq.s32.totalorder %s74, 0
      %s77 = sadd.s32 %s76, 1
      %s78 = scalar_select %p75, %s76, %s77
      %p81 = pneg %p75
      %p82 = scmp.eq.s32.totalorder %s19, 3
      %p83 = por %p81, %p82
      %p84 = scmp.ne.s32.totalorder %s76, %s79
      %p85 = scmp.eq.s32.totalorder %s19, 0
      %p86 = por %p84, %p85
      %p87 = scmp.ne.s32.totalorder %s76, %s79
      %p88 = scmp.eq.s32.totalorder %s24, 3
      %p89 = por %p87, %p88
      %p90 = scmp.ne.s32.totalorder %s79, %s80
      %p91 = scmp.eq.s32.totalorder %s24, 0
      %p92 = por %p90, %p91
      %p93 = scmp.ne.s32.totalorder %s79, %s80
      %p94 = scmp.eq.s32.totalorder %s25, 3
      %p95 = por %p93, %p94
      %p97 = scmp.ne.s32.totalorder %s80, %s96
      %p98 = scmp.eq.s32.totalorder %s25, 0
      %p99 = por %p97, %p98
      %p100 = scmp.le.s32.totalorder 1, %s19
      %p101 = scmp.lt.s32.totalorder %s19, 5
      %p102 = pnand %p100, %p101
      %p103 = pneg %p102
      // Predicated region
      $region9: #{tpu_custom_call.1} parent=5 // pred_check
        _
      $region10: #{tpu_custom_call.1} parent=5 // pred_check_branch
        %105 = sbr.rel (%p102) target = $region12
      $region11: #{tpu_custom_call.1} parent=5 // pred_region
        %s106 = ssub.s32 %s19, 1
        // Predicated region
        $region13: #{tpu_custom_call.1} parent=11 // pred_check
          %p107 = pneg %p66
        $region14: #{tpu_custom_call.1} parent=11 // pred_check_branch
          %109 = sbr.rel (%p107) target = $region16
        $region15: #{tpu_custom_call.1} parent=11 // pred_region
          _
        $region16: #{tpu_custom_call.1} parent=11 // pred_fallthru
          _
      $region12: #{tpu_custom_call.1} parent=5 // pred_fallthru
        _
      %p110 = scmp.lt.s32.totalorder %s19, 4
      // Predicated region
      $region17: #{tpu_custom_call.1} parent=5 // pred_check
        %p111 = pneg %p110
      $region18: #{tpu_custom_call.1} parent=5 // pred_check_branch
        %113 = sbr.rel (%p111) target = $region20
      $region19: #{tpu_custom_call.1} parent=5 // pred_region
        // Predicated region
        $region21: #{tpu_custom_call.1} parent=19 // pred_check
          %p114 = pneg %p39
        $region22: #{tpu_custom_call.1} parent=19 // pred_check_branch
          %116 = sbr.rel (%p114) target = $region24
        $region23: #{tpu_custom_call.1} parent=19 // pred_region
          %s117 = sand.u32 %s29, 1
          %s118 = scalar_lea.sflag [#allocation5], %s117
          %s119 = sand.u32 %s29, 1
          %s120 = smul.addr %s119, 16
          %s121 = scalar_lea.vmem [#allocation4], %s120
          %s123 = ssub.s32 256, 256
          %124 = vsyncadd %s118, %s123
          %s125 = smul.addr %s19, 2
          %s126 = smul.addr %s125, 128
          %s127 = scalar_lea.hbm %s1, %s126
          %s129 = sshll.u32 %s121, 4
          %s130 = int_to_ptr.vmem [resolvable:$true] %s129
          %132 = dma.hbm_to_vmem [thread:$0]  %s127, 256, %s130, %s118
        $region24: #{tpu_custom_call.1} parent=19 // pred_fallthru
          _
      $region20: #{tpu_custom_call.1} parent=5 // pred_fallthru
        _
      %p133 = scmp.le.s32.totalorder 1, %s19
      %p134 = scmp.lt.s32.totalorder %s19, 5
      %p135 = pnand %p133, %p134
      %p136 = pneg %p135
      // Predicated region
      $region25: #{tpu_custom_call.1} parent=5 // pred_check
        _
      $region26: #{tpu_custom_call.1} parent=5 // pred_check_branch
        %138 = sbr.rel (%p135) target = $region28
      $region27: #{tpu_custom_call.1} parent=5 // pred_region
        %s139 = ssub.s32 %s19, 1
        %s140 = sand.u32 %s32, 1
        %s141 = scalar_lea.sflag [#allocation5], %s140
        %s142 = sand.u32 %s32, 1
        %s143 = smul.addr %s142, 16
        %s144 = scalar_lea.vmem [#allocation4], %s143
        // Predicated region
        $region29: #{tpu_custom_call.1} parent=27 // pred_check
          %p145 = pneg %p45
        $region30: #{tpu_custom_call.1} parent=27 // pred_check_branch
          %147 = sbr.rel (%p145) target = $region32
        $region31: #{tpu_custom_call.1} parent=27 // pred_region
          %148 = dma.done %s141, 256
        $region32: #{tpu_custom_call.1} parent=27 // pred_fallthru
          _
        %s149 = sand.u32 %s32, 1
        %s150 = scalar_lea.sflag [#allocation5], %s149
        %s151 = sand.u32 %s32, 1
        %s152 = smul.addr %s151, 16
        %s153 = scalar_lea.vmem [#allocation4], %s152
        %p154 = pneg %p45
        %p155 = pneg %p42
        %p156 = pneg %p66
        %p157 = pneg %p63
        %p158 = pneg %p92
        %p159 = pneg %p89
        %s160 = sand.u32 %s79, 1
        %s161 = scalar_lea.sflag [#allocation6], %s160
        %s162 = sand.u32 %s79, 1
        %s163 = smul.addr %s162, 8
        %s164 = scalar_lea.vmem [#allocation7], %s163
        %v165 = vld [vmem:[%s144] sm:$0xff]
        %v166 = vld [vmem:[%s144 + $0x8] sm:$0xff]
        %v167 = vld [vmem:[%s2] sm:$0x1]
        %s168 = sld [smem:[#allocation3]]
        %s169 = sld [smem:[#allocation3 + $0x1]]
        %s170 = sld [smem:[#allocation3 + $0x2]]
        %s171 = sld [smem:[#allocation3 + $0x3]]
        %v172 = vadd.f32 %v166, 1e-06
        %v173 = vlog2.pop %v172
        %v174 = vmul.f32 %v173, 0.6931472
        %v176 = vlaneseq
        %v177 = vshrl.u32 %v176, 7
        %v178 = vsub.s32 0, %v177
        %v179 = vrot.slane %v167, %v178
        %v181 = vmul.f32 %v165, %v179
        %182 = vadd.xlane.f32.xlu0 %v181
        %v183 = vpop.xlane.xlu0 %182
        %v184 = vstv %s170
        %v185 = vmul.f32 %v183, %v184
        %v186 = vmul.f32 %v174, %v179
        %187 = vadd.xlane.f32.xlu0 %v186
        %v188 = vpop.xlane.xlu0 %187
        %v189 = vmul.f32 %v188, 1.442695
        %v190 = vpow.pop %v189
        %v191 = vstv %s171
        %v192 = vadd.f32 %v190, %v191
        %v193 = vsub.f32 %v165, %v185
        %v194 = vand.u32 2147483647, %v193
        %v195 = vadd.f32 %v192, 1e-06
        %v196 = vlog2.pop %v195
        %v197 = vmul.f32 %v196, 0.6931472
        %v198 = vsub.f32 %v174, %v197
        %v199 = vand.u32 2147483647, %v198
        %v200 = vstv %s168
        %v201 = vmul.f32 %v200, %v194
        %v202 = vstv %s169
        %v203 = vmul.f32 %v202, %v199
        %v204 = vadd.f32 %v201, %v203
        %205 = vst [vmem:[%s164] sm:$0xff] %v204
        %s206 = sand.u32 %s79, 1
        %s207 = scalar_lea.sflag [#allocation6], %s206
        %s208 = sand.u32 %s79, 1
        %s209 = smul.addr %s208, 8
        %s210 = scalar_lea.vmem [#allocation7], %s209
        // Predicated region
        $region33: #{tpu_custom_call.1} parent=27 // pred_check
          %p211 = pneg %p89
        $region34: #{tpu_custom_call.1} parent=27 // pred_check_branch
          %213 = sbr.rel (%p211) target = $region36
        $region35: #{tpu_custom_call.1} parent=27 // pred_region
          %s215 = ssub.s32 128, 128
          %216 = vsyncadd %s207, %s215
          %s217 = smul.addr %s24, 128
          %s218 = scalar_lea.hbm %s3, %s217
          %s220 = sshll.u32 %s210, 4
          %s221 = int_to_ptr.vmem [resolvable:$true] %s220
          %223 = dma.vmem_to_hbm [thread:$0]  %s221, 128, %s218, %s207
        $region36: #{tpu_custom_call.1} parent=27 // pred_fallthru
          _
      $region28: #{tpu_custom_call.1} parent=5 // pred_fallthru
        _
      %p224 = scmp.le.s32.totalorder 2, %s19
      // Predicated region
      $region37: #{tpu_custom_call.1} parent=5 // pred_check
        %p225 = pneg %p224
      $region38: #{tpu_custom_call.1} parent=5 // pred_check_branch
        %227 = sbr.rel (%p225) target = $region40
      $region39: #{tpu_custom_call.1} parent=5 // pred_region
        %s228 = ssub.s32 %s19, 2
        // Predicated region
        $region41: #{tpu_custom_call.1} parent=39 // pred_check
          %p229 = pneg %p95
        $region42: #{tpu_custom_call.1} parent=39 // pred_check_branch
          %231 = sbr.rel (%p229) target = $region44
        $region43: #{tpu_custom_call.1} parent=39 // pred_region
          %s232 = sand.u32 %s80, 1
          %s233 = scalar_lea.sflag [#allocation6], %s232
          %s234 = sand.u32 %s80, 1
          %s235 = smul.addr %s234, 8
          %s236 = scalar_lea.vmem [#allocation7], %s235
          %237 = dma.done %s233, 128
        $region44: #{tpu_custom_call.1} parent=39 // pred_fallthru
          _
      $region40: #{tpu_custom_call.1} parent=5 // pred_fallthru
        _
    $region6: #{tpu_custom_call.1} parent=1 // loop_footer
      %s23 = sadd.s32 1, %s19
    $region7: #{tpu_custom_call.1} parent=1 // loop_footer_branch
      %18 = sbr.rel target = $region3
    $region8: #{tpu_custom_call.1} parent=1 // loop_exit
      _
    %238 = vsyncpa [#allocation5], 1
    %s239 = scalar_lea.sflag [#allocation5], 1
    %240 = vsyncpa %s239, 1
    %241 = vsyncpa [#allocation6], 1
    %s242 = scalar_lea.sflag [#allocation6], 1
    %243 = vsyncpa %s242, 1

</llo_original>
